<compile_context>
chip_gen: v7x
topology: tpu7x:2x2x1
jax: 0.10.0
libtpu: 0.0.40
codegen_flags: <defaults>
</compile_context>

<pallas_src>
import functools

import numpy as np
import jax
import jax.numpy as jnp
from jax.experimental import pallas as pl
from jax.experimental.pallas import tpu as pltpu


# --------------------------------------------------------------------------- #
# Kernel 1: Wh = h @ W  and packed attention scores  s = Wh @ [a1 | a2]
# --------------------------------------------------------------------------- #
def _project_kernel(h_ref, w_ref, a_ref, wh_ref, s_ref, *, matmul_dtype):
    h = h_ref[...].astype(matmul_dtype)
    w = w_ref[...].astype(matmul_dtype)
    wh = jnp.dot(h, w, preferred_element_type=jnp.float32)            # (T, Fp) f32
    # one (Fp, 2) RHS instead of two (Fp, 1) matvecs; logits built from the
    # f32 accumulation.
    s = jnp.dot(wh, a_ref[...], preferred_element_type=jnp.float32)   # (T, 2)
    wh_ref[...] = wh.astype(wh_ref.dtype)
    s_ref[...] = s


# --------------------------------------------------------------------------- #
# Kernel 2: masked online-softmax attention  +  attention @ Wh  +  ELU
# --------------------------------------------------------------------------- #
def _attn_kernel(adj_ref, s1_ref, s2_ref, wh_ref, out_ref,
                 m_scr, l_scr, acc_scr, *,
                 alpha, concat, softmax_dtype, approx_recip):
    kj = pl.program_id(1)

    @pl.when(kj == 0)
    def _():
        m_scr[...] = jnp.full(m_scr.shape, -jnp.inf, jnp.float32)
        l_scr[...] = jnp.zeros(l_scr.shape, jnp.float32)
        acc_scr[...] = jnp.zeros(acc_scr.shape, jnp.float32)

    # attention logits for this (row, col) block: e = LeakyReLU(s1 + s2)
    s1 = s1_ref[...].astype(softmax_dtype)        # (T, 1)
    s2 = s2_ref[...].astype(softmax_dtype)        # (1, K)
    e = s1 + s2                                   # (T, K)
    e = jnp.maximum(e, alpha * e)                 # LeakyReLU via mul+max (0<alpha<1)
    # keep the -9e15 select: matches the reference exactly (incl. neighbourless
    # rows -> uniform softmax) and avoids the 0/0 risk of a post-exp mask.
    logits = jnp.where(adj_ref[...] != 0, e, -9e15)

    # online (flash-style) softmax update; reductions / running stats in f32.
    m_prev = m_scr[...]                                                  # (T,1)
    m_blk = jnp.max(logits.astype(jnp.float32), axis=1, keepdims=True)
    m_new = jnp.maximum(m_prev, m_blk)
    corr = jnp.exp(m_prev - m_new)                                       # (T,1)

    p = jnp.exp(logits - m_new.astype(softmax_dtype))                    # (T,K)
    l_scr[...] = corr * l_scr[...] + jnp.sum(
        p.astype(jnp.float32), axis=1, keepdims=True)

    wh = wh_ref[...]                                                     # (K,Fp)
    acc_scr[...] = corr * acc_scr[...] + jnp.dot(
        p.astype(wh.dtype), wh, preferred_element_type=jnp.float32)
    m_scr[...] = m_new

    # TODO(synk): F.dropout on the attention matrix is identity in eval mode
    # (training=False); training-mode dropout (pltpu.prng_*) is omitted here.

    @pl.when(kj == pl.num_programs(1) - 1)
    def _():
        h_prime = acc_scr[...] * pl.reciprocal(l_scr[...], approx=approx_recip)
        if concat:
            # ELU (alpha=1.0, PyTorch default), expm1 for precision near 0
            h_prime = jnp.where(h_prime > 0, h_prime, jnp.expm1(h_prime))
        out_ref[...] = h_prime.astype(out_ref.dtype)


# --------------------------------------------------------------------------- #
# Wrapper
# --------------------------------------------------------------------------- #
def _vmem_capacity_bytes():
    try:
        return int(getattr(pltpu.get_tpu_info(), "vmem_capacity_bytes"))
    except Exception:
        return 64 << 20   # conservative: v7x per-TensorCore physical VMEM


def _kernel2_vmem_estimate(tile_n, tile_k, fp, wh_bytes, sm_bytes):
    return (2 * (tile_n * tile_k                 # adj block (int8), double-buffered
                 + tile_n * 4 + tile_k * 4       # s1, s2 blocks
                 + tile_k * fp * wh_bytes        # Wh column block
                 + tile_n * fp * 4)              # output tile (f32)
            + tile_n * (8 + fp * 4)              # m / l / acc scratch
            + 8 * tile_n * tile_k * sm_bytes     # elementwise temporaries
            + (2 << 20))                         # headroom


def _auto_tiles(n, fp, wh_bytes, sm_bytes, budget):
    cands = (1024, 512, 256, 128, 64, 32)
    # row tile: keep >= 2 row tiles where possible so v7x's two TensorCores
    # both get work under dimension_semantics=("parallel", ...).
    tile_n = next((c for c in cands if c <= max(n // 2, 32) and n % c == 0), n)
    # column tile: biggest candidate whose per-step footprint fits the budget.
    for c in cands:
        if c <= n and n % c == 0 and \
                _kernel2_vmem_estimate(tile_n, c, fp, wh_bytes, sm_bytes) <= budget:
            return tile_n, c
    return tile_n, next((c for c in reversed(cands) if c <= n and n % c == 0), n)


def gat_layer(h, adj, W, a, *, alpha, concat=True,
              tile_n=None, tile_k=None,
              matmul_dtype=jnp.bfloat16, softmax_dtype=jnp.float32):
    """Pallas GAT forward (eval mode).

    h:(N,F_in) f32, adj:(N,N) int8 mask, W:(F_in,F_out), a:(2*F_out,1).
    softmax_dtype=jnp.bfloat16 runs the elementwise softmax chain packed on the
    VPU/EUP (recommended on v6e/v7x; keep f32 on v5e).
    """
    N, f_in = h.shape
    f_out = W.shape[1]
    assert adj.shape == (N, N)
    assert a.shape == (2 * f_out, 1)

    # lane-pad F_out to a multiple of 128: lane-dense stores, full MXU columns.
    # TODO(synk): a multi-head GAT would stack heads along this padded axis and
    # share the adj tile / softmax work across heads in one kernel-2 pass.
    fp = ((f_out + 127) // 128) * 128
    W_pad = jnp.pad(W.astype(jnp.float32), ((0, 0), (0, fp - f_out)))
    a_pack = jnp.concatenate([a[:f_out, :], a[f_out:, :]], axis=1)     # (f_out, 2)
    a_pack = jnp.pad(a_pack.astype(jnp.float32), ((0, fp - f_out), (0, 0)))

    # adjacency should already be int8 (1 byte/elem of N^2 HBM traffic).
    # TODO(synk): callers should pre-convert adj once per graph and reuse it
    # across layers/heads; this fallback is a full N^2 XLA pass per call.
    if adj.dtype != jnp.int8:
        adj = (adj != 0).astype(jnp.int8)

    wh_bytes = np.dtype(matmul_dtype).itemsize
    sm_bytes = np.dtype(softmax_dtype).itemsize
    vmem_cap = _vmem_capacity_bytes()
    budget = int(0.75 * vmem_cap)

    if tile_n is None or tile_k is None:
        auto_n, auto_k = _auto_tiles(N, fp, wh_bytes, sm_bytes, budget)
        tile_n = auto_n if tile_n is None else tile_n
        tile_k = auto_k if tile_k is None else tile_k

    assert N % tile_n == 0 and N % tile_k == 0, "tile sizes must divide N"
    assert tile_n % 32 == 0 or tile_n == N, "tile_n: multiple of 32 (int8 sublanes)"
    assert tile_k % 128 == 0 or tile_k == N, "tile_k: multiple of 128 (lanes)"

    est2 = _kernel2_vmem_estimate(tile_n, tile_k, fp, wh_bytes, sm_bytes)
    assert est2 <= budget, (
        f"kernel-2 VMEM estimate {est2 >> 20} MiB exceeds budget "
        f"{budget >> 20} MiB; reduce tile_n / tile_k")
    vmem_limit2 = int(min(budget, max(est2, 16 << 20)))

    grid_rows = N // tile_n
    grid_cols = N // tile_k
    approx_recip = (np.dtype(matmul_dtype) != np.dtype(jnp.float32)
                    or np.dtype(softmax_dtype) != np.dtype(jnp.float32))

    # ---- kernel 1: Wh and packed attention scores --------------------------
    cost1 = pl.CostEstimate(
        flops=2 * N * f_in * fp + 2 * N * fp * 2,
        transcendentals=0,
        bytes_accessed=(N * f_in * 4 + f_in * fp * 4 + fp * 2 * 4
                        + N * fp * wh_bytes + N * 2 * 4))
    wh, scores = pl.pallas_call(
        functools.partial(_project_kernel, matmul_dtype=matmul_dtype),
        grid=(grid_rows,),
        in_specs=[
            pl.BlockSpec((tile_n, f_in), lambda i: (i, 0)),   # h row tile
            # W / a_pack are grid-invariant; their footprint (f_in*fp) is tiny,
            # so default double-buffering is left as-is.
            pl.BlockSpec((f_in, fp), lambda i: (0, 0)),
            pl.BlockSpec((fp, 2), lambda i: (0, 0)),
        ],
        out_specs=(
            pl.BlockSpec((tile_n, fp), lambda i: (i, 0)),     # Wh row tile
            pl.BlockSpec((tile_n, 2), lambda i: (i, 0)),      # packed scores
        ),
        out_shape=(
            jax.ShapeDtypeStruct((N, fp), matmul_dtype),      # narrow Wh for kernel 2
            jax.ShapeDtypeStruct((N, 2), jnp.float32),
        ),
        compiler_params=pltpu.CompilerParams(
            dimension_semantics=("parallel",)),
        cost_estimate=cost1,
    )(h, W_pad, a_pack)

    # tiny (N,2) relayout done once outside the kernels
    s1 = scores[:, 0:1]                   # (N, 1) row term
    s2 = scores[:, 1:2].reshape(1, N)     # (1, N) column term, pre-transposed

    # ---- kernel 2: online-softmax attention + attention @ Wh + ELU ---------
    cost2 = pl.CostEstimate(
        flops=2 * N * N * fp + 10 * N * N,
        transcendentals=N * N,
        bytes_accessed=(N * N                              # adj (int8)
                        + grid_rows * N * fp * wh_bytes    # Wh re-streamed per row tile
                        + grid_rows * N * 4                # s2 re-streamed per row tile
                        + N * 4 + N * fp * 4))             # s1 + output
    out_full = pl.pallas_call(
        functools.partial(_attn_kernel, alpha=float(alpha), concat=bool(concat),
                          softmax_dtype=softmax_dtype, approx_recip=approx_recip),
        grid=(grid_rows, grid_cols),
        in_specs=[
            pl.BlockSpec((tile_n, tile_k), lambda i, j: (i, j)),   # adj block (int8)
            pl.BlockSpec((tile_n, 1), lambda i, j: (i, 0)),        # s1 row term
            pl.BlockSpec((1, tile_k), lambda i, j: (0, j)),        # s2 col term
            pl.BlockSpec((tile_k, fp), lambda i, j: (j, 0)),       # Wh column block
        ],
        out_specs=pl.BlockSpec((tile_n, fp), lambda i, j: (i, 0)),  # resident over j
        out_shape=jax.ShapeDtypeStruct((N, fp), jnp.float32),
        scratch_shapes=[
            pltpu.VMEM((tile_n, 1), jnp.float32),    # running max
            pltpu.VMEM((tile_n, 1), jnp.float32),    # running denominator
            pltpu.VMEM((tile_n, fp), jnp.float32),   # f32 output accumulator
        ],
        compiler_params=pltpu.CompilerParams(
            dimension_semantics=("parallel", "arbitrary"),
            vmem_limit_bytes=vmem_limit2),
        cost_estimate=cost2,
    )(adj, s1, s2, wh)

    # TODO(synk): block-sparse skipping of all-zero (tile_n, tile_k) adj blocks
    # (PrefetchScalarGridSpec bitmap + pl.when) would cut the dominant VALU/EUP
    # and adj DMA work by the block-sparsity factor on genuinely sparse graphs.

    # padded feature columns are zero; slice off (fuse downstream if possible).
    return out_full[:, :f_out] if fp != f_out else out_full


# --------------------------------------------------------------------------- #
# Reference & demo
# --------------------------------------------------------------------------- #
def xavier_uniform(key, shape, gain):
    fan_in, fan_out = shape
    bound = gain * jnp.sqrt(6.0 / (fan_in + fan_out))
    return jax.random.uniform(key, shape, jnp.float32, minval=-bound, maxval=bound)


def gat_reference(h, adj, W, a, *, alpha, concat=True):
    """Pure-JAX reference mirroring the PyTorch forward (eval mode)."""
    f_out = W.shape[1]
    Wh = h @ W
    e = Wh @ a[:f_out, :] + (Wh @ a[f_out:, :]).T
    e = jnp.where(e > 0, e, alpha * e)
    logits = jnp.where(adj > 0, e, -9e15)
    attention = jax.nn.softmax(logits, axis=1)
    h_prime = attention @ Wh
    return jax.nn.elu(h_prime) if concat else h_prime


if __name__ == "__main__":
    # Small GAT config (eval mode, concat=True).
    N = 256
    in_features = 64
    out_features = 32
    dropout = 0.6     # unused at eval time
    alpha = 0.2       # LeakyReLU negative slope

    key = jax.random.PRNGKey(0)
    k_w, k_a, k_h, k_adj = jax.random.split(key, 4)

    W = xavier_uniform(k_w, (in_features, out_features), gain=1.414)
    a = xavier_uniform(k_a, (2 * out_features, 1), gain=1.414)

    h = jax.random.normal(k_h, (N, in_features), dtype=jnp.float32)
    # sparse-ish symmetric adjacency with self-loops, pre-converted to int8
    adj_rand = (jax.random.uniform(k_adj, (N, N)) < 0.15).astype(jnp.int8)
    adj = jnp.maximum(adj_rand, adj_rand.T)
    adj = jnp.maximum(adj, jnp.eye(N, dtype=jnp.int8))

    ref = gat_reference(h, adj, W, a, alpha=alpha, concat=True)

    # 1) all-f32 path with an explicit 2x2 grid so the multi-block online
    #    softmax (running max / denominator / correction) is exercised; exact divide.
    out_f32 = gat_layer(h, adj, W, a, alpha=alpha, concat=True,
                        tile_n=128, tile_k=128,
                        matmul_dtype=jnp.float32, softmax_dtype=jnp.float32)
    out_f32 = jax.block_until_ready(out_f32)
    assert out_f32.shape == (N, out_features)
    assert jnp.allclose(out_f32, ref, atol=2e-3, rtol=2e-3), "f32 path mismatch"

    # 2) default perf path: bf16 MXU inputs + f32 softmax chain, auto tiles.
    out_bf16 = gat_layer(h, adj, W, a, alpha=alpha, concat=True,
                         matmul_dtype=jnp.bfloat16, softmax_dtype=jnp.float32)
    out_bf16 = jax.block_until_ready(out_bf16)
    assert out_bf16.shape == (N, out_features)
    assert jnp.allclose(out_bf16, ref, atol=5e-2, rtol=5e-2), "bf16 MXU path mismatch"

    # 3) v6e/v7x fast path: bf16 elementwise softmax chain as well (packed
    #    VPU/EUP); reductions / running stats / accumulator stay f32.
    out_fast = gat_layer(h, adj, W, a, alpha=alpha, concat=True,
                         matmul_dtype=jnp.bfloat16, softmax_dtype=jnp.bfloat16)
    out_fast = jax.block_until_ready(out_fast)
    assert out_fast.shape == (N, out_features)
    assert jnp.allclose(out_fast, ref, atol=1e-1, rtol=1e-1), "bf16 softmax path mismatch"

    print("KERNEL_OK")
</pallas_src>

<mosaic_0001>
module attributes {stable_mosaic.version = 11 : i64} {
  func.func @_project_kernel(%arg0: i32, %arg1: memref<128x64xf32, #tpu.memory_space<vmem>>, %arg2: memref<64x128xf32, #tpu.memory_space<vmem>>, %arg3: memref<128x2xf32, #tpu.memory_space<vmem>>, %arg4: memref<128x128xf32, #tpu.memory_space<vmem>>, %arg5: memref<128x2xf32, #tpu.memory_space<vmem>>) attributes {dimension_semantics = [#tpu.dimension_semantics<parallel>], iteration_bounds = array<i64: 2>, scalar_prefetch = 0 : i64, scratch_operands = 0 : i64, tpu.core_type = #tpu.core_type<tc>, window_params = [{transform_indices = @transform_0, window_bounds = array<i64: 128, 64>}, {pipeline_mode = #tpu.pipeline_mode<synchronous>, transform_indices = @transform_1, window_bounds = array<i64: 64, 128>}, {pipeline_mode = #tpu.pipeline_mode<synchronous>, transform_indices = @transform_2, window_bounds = array<i64: 128, 2>}, {transform_indices = @transform_3, window_bounds = array<i64: 128, 128>}, {transform_indices = @transform_4, window_bounds = array<i64: 128, 2>}]} {
    %c0 = arith.constant 0 : index
    %c0_0 = arith.constant 0 : index
    %0 = vector.load %arg1[%c0, %c0_0] : memref<128x64xf32, #tpu.memory_space<vmem>>, vector<128x64xf32>
    %c0_1 = arith.constant 0 : index
    %c0_2 = arith.constant 0 : index
    %1 = vector.load %arg2[%c0_1, %c0_2] : memref<64x128xf32, #tpu.memory_space<vmem>>, vector<64x128xf32>
    %cst = arith.constant dense<0.000000e+00> : vector<128x128xf32>
    %2 = tpu.matmul %0, %1, %cst {dimension_numbers = #tpu.dot_dimension_numbers<[1], [0], [0], [1], [0, 0, 1, 1], [], []>} : vector<128x64xf32>, vector<64x128xf32>, vector<128x128xf32> -> vector<128x128xf32>
    %c0_3 = arith.constant 0 : index
    %c0_4 = arith.constant 0 : index
    %3 = vector.load %arg3[%c0_3, %c0_4] : memref<128x2xf32, #tpu.memory_space<vmem>>, vector<128x2xf32>
    %cst_5 = arith.constant dense<0.000000e+00> : vector<128x2xf32>
    %4 = tpu.matmul %2, %3, %cst_5 {dimension_numbers = #tpu.dot_dimension_numbers<[1], [0], [0], [1], [0, 0, 1, 1], [], []>} : vector<128x128xf32>, vector<128x2xf32>, vector<128x2xf32> -> vector<128x2xf32>
    %c0_6 = arith.constant 0 : index
    %c0_7 = arith.constant 0 : index
    %5 = vector.load %arg4[%c0_6, %c0_7] : memref<128x128xf32, #tpu.memory_space<vmem>>, vector<128x128xf32>
    tpu.vector_store %arg4[%c0_6, %c0_7], %2 {strides = array<i32>} : memref<128x128xf32, #tpu.memory_space<vmem>>, vector<128x128xf32>,
    %c0_8 = arith.constant 0 : index
    %c0_9 = arith.constant 0 : index
    %6 = vector.load %arg5[%c0_8, %c0_9] : memref<128x2xf32, #tpu.memory_space<vmem>>, vector<128x2xf32>
    tpu.vector_store %arg5[%c0_8, %c0_9], %4 {strides = array<i32>} : memref<128x2xf32, #tpu.memory_space<vmem>>, vector<128x2xf32>,
    return
  }
  func.func @transform_0(%arg0: i32) -> (i32, i32) {
    %c0_i32 = arith.constant 0 : i32
    %c0_i32_0 = arith.constant 0 : i32
    return %arg0, %c0_i32 : i32, i32
  }
  func.func @transform_1(%arg0: i32) -> (i32, i32) {
    %c0_i32 = arith.constant 0 : i32
    %c0_i32_0 = arith.constant 0 : i32
    %c0_i32_1 = arith.constant 0 : i32
    return %c0_i32, %c0_i32_0 : i32, i32
  }
  func.func @transform_2(%arg0: i32) -> (i32, i32) {
    %c0_i32 = arith.constant 0 : i32
    %c0_i32_0 = arith.constant 0 : i32
    %c0_i32_1 = arith.constant 0 : i32
    return %c0_i32, %c0_i32_0 : i32, i32
  }
  func.func @transform_3(%arg0: i32) -> (i32, i32) {
    %c0_i32 = arith.constant 0 : i32
    %c0_i32_0 = arith.constant 0 : i32
    return %arg0, %c0_i32 : i32, i32
  }
  func.func @transform_4(%arg0: i32) -> (i32, i32) {
    %c0_i32 = arith.constant 0 : i32
    %c0_i32_0 = arith.constant 0 : i32
    return %arg0, %c0_i32 : i32, i32
  }
}

</mosaic_0001>

<llo_original>
// kernel: tpu_custom_call.1
$region0: #{tpu_custom_call.1}
  #allocation0 [shape = 'u32[]', space=smem, size = 0x4, offset = 0x4, fixed_abs, tag = 'smem constant byte address 0x4 - core index']
  #allocation1 [shape = 'u32[144,128]{1,0:T(1,128)}', space=vmem, size = 0x12000, scoped, tag = 'internal scratch']
  %s0 = inlined_call_operand.vmem [shape: f32[256,64], index: 0, kind: input, shape index: {}]
  %s1 = inlined_call_operand.vmem [shape: f32[64,128], index: 1, kind: input, shape index: {}]
  %s2 = inlined_call_operand.vmem [shape: f32[128,2], index: 2, kind: input, shape index: {}]
  %s3 = inlined_call_operand.hbm [shape: f32[256,128], index: 3, kind: output, shape index: {0}]
  %s4 = inlined_call_operand.vmem [shape: f32[256,2], index: 4, kind: output, shape index: {1}]
  %5 = xla_tuple %s3, %s4
  %s6 = sld [smem:[#allocation0]]
  $region53: #{tpu_custom_call.1} parent=0
    _
  %s8 = ssub.s32 1, %s6
  %s9 = scalar_select 0, %s8, %s6
  $region1: #{tpu_custom_call.1} parent=0
    #allocation2 [shape = 'u8[131072]{0}', space=vmem, size = 0x20000, scoped, tag = 'output window, operand 0']
    #allocation3 [shape = 's32[2]{0}', space=sflag, size = 0x8, scoped, tag = 'scoped memory for tpu_custom_call.1']
    %10 = vsyncpa [#allocation3], 0
    %s11 = scalar_lea.sflag [#allocation3], 1
    %12 = vsyncpa %s11, 0
    loop: start=0, step=1, limit=4
    $region2: #{tpu_custom_call.1} parent=1 // loop_pre_header
      _
    $region3: #{tpu_custom_call.1} parent=1 // loop_header
      %s14 = sphi 0, %s18
      %p15 = scmp.ge.s32.totalorder %s14, 4
      %s24 = sphi 0, %s26
      %s27 = sphi 0, %s24
      %s28 = sphi 0, %s27
      %s44 = sphi 0, %s28
      %s48 = sphi 0, %s48
      %s50 = sphi 0, %s48
      %s51 = sphi 0, %s50
      %s65 = sphi 0, %s51
      %s69 = sphi 0, %s69
      %s71 = sphi 0, %s69
      %s72 = sphi 0, %s71
      %s86 = sphi 0, %s72
      %s92 = sphi 0, %s94
      %s95 = sphi 0, %s92
      %s96 = sphi 0, %s95
      %s112 = sphi 0, %s96
      %s118 = sphi 0, %s120
      %s121 = sphi 0, %s118
      %s122 = sphi 0, %s121
      %s138 = sphi 0, %s122
    $region4: #{tpu_custom_call.1} parent=1 // loop_header_branch
      %17 = sbr.rel (%p15) target = $region8
    $region5: #{tpu_custom_call.1} parent=1 // loop_body
      %s19 = ssub.s32 %s14, 1
      %s20 = ssub.s32 %s14, 2
      %s21 = sadd.s32 %s14, 1
      %s22 = ssub.s32 %s14, %s21
      %p23 = scmp.eq.s32.totalorder %s22, 0
      %s25 = sadd.s32 %s24, 1
      %s26 = scalar_select %p23, %s24, %s25
      %p29 = pneg %p23
      %p30 = scmp.eq.s32.totalorder %s14, 1
      %p31 = por %p29, %p30
      %p32 = scmp.ne.s32.totalorder %s24, %s27
      %p33 = scmp.eq.s32.totalorder %s14, 0
      %p34 = por %p32, %p33
      %p35 = scmp.ne.s32.totalorder %s24, %s27
      %p36 = scmp.eq.s32.totalorder %s19, 1
      %p37 = por %p35, %p36
      %p38 = scmp.ne.s32.totalorder %s27, %s28
      %p39 = scmp.eq.s32.totalorder %s19, 0
      %p40 = por %p38, %p39
      %p41 = scmp.ne.s32.totalorder %s27, %s28
      %p42 = scmp.eq.s32.totalorder %s20, 1
      %p43 = por %p41, %p42
      %p45 = scmp.ne.s32.totalorder %s28, %s44
      %p46 = scmp.eq.s32.totalorder %s20, 0
      %p47 = por %p45, %p46
      %s49 = sadd.s32 %s48, 1
      %p52 = scmp.eq.s32.totalorder %s14, 1
      %p53 = scmp.ne.s32.totalorder %s48, %s50
      %p54 = scmp.eq.s32.totalorder %s14, 0
      %p55 = por %p53, %p54
      %p56 = scmp.ne.s32.totalorder %s48, %s50
      %p57 = scmp.eq.s32.totalorder %s19, 1
      %p58 = por %p56, %p57
      %p59 = scmp.ne.s32.totalorder %s50, %s51
      %p60 = scmp.eq.s32.totalorder %s19, 0
      %p61 = por %p59, %p60
      %p62 = scmp.ne.s32.totalorder %s50, %s51
      %p63 = scmp.eq.s32.totalorder %s20, 1
      %p64 = por %p62, %p63
      %p66 = scmp.ne.s32.totalorder %s51, %s65
      %p67 = scmp.eq.s32.totalorder %s20, 0
      %p68 = por %p66, %p67
      %s70 = sadd.s32 %s69, 1
      %p73 = scmp.eq.s32.totalorder %s14, 1
      %p74 = scmp.ne.s32.totalorder %s69, %s71
      %p75 = scmp.eq.s32.totalorder %s14, 0
      %p76 = por %p74, %p75
      %p77 = scmp.ne.s32.totalorder %s69, %s71
      %p78 = scmp.eq.s32.totalorder %s19, 1
      %p79 = por %p77, %p78
      %p80 = scmp.ne.s32.totalorder %s71, %s72
      %p81 = scmp.eq.s32.totalorder %s19, 0
      %p82 = por %p80, %p81
      %p83 = scmp.ne.s32.totalorder %s71, %s72
      %p84 = scmp.eq.s32.totalorder %s20, 1
      %p85 = por %p83, %p84
      %p87 = scmp.ne.s32.totalorder %s72, %s86
      %p88 = scmp.eq.s32.totalorder %s20, 0
      %p89 = por %p87, %p88
      %s90 = ssub.s32 %s14, %s21
      %p91 = scmp.eq.s32.totalorder %s90, 0
      %s93 = sadd.s32 %s92, 1
      %s94 = scalar_select %p91, %s92, %s93
      %p97 = pneg %p91
      %p98 = scmp.eq.s32.totalorder %s14, 1
      %p99 = por %p97, %p98
      %p100 = scmp.ne.s32.totalorder %s92, %s95
      %p101 = scmp.eq.s32.totalorder %s14, 0
      %p102 = por %p100, %p101
      %p103 = scmp.ne.s32.totalorder %s92, %s95
      %p104 = scmp.eq.s32.totalorder %s19, 1
      %p105 = por %p103, %p104
      %p106 = scmp.ne.s32.totalorder %s95, %s96
      %p107 = scmp.eq.s32.totalorder %s19, 0
      %p108 = por %p106, %p107
      %p109 = scmp.ne.s32.totalorder %s95, %s96
      %p110 = scmp.eq.s32.totalorder %s20, 1
      %p111 = por %p109, %p110
      %p113 = scmp.ne.s32.totalorder %s96, %s112
      %p114 = scmp.eq.s32.totalorder %s20, 0
      %p115 = por %p113, %p114
      %s116 = ssub.s32 %s14, %s21
      %p117 = scmp.eq.s32.totalorder %s116, 0
      %s119 = sadd.s32 %s118, 1
      %s120 = scalar_select %p117, %s118, %s119
      %p123 = pneg %p117
      %p124 = scmp.eq.s32.totalorder %s14, 1
      %p125 = por %p123, %p124
      %p126 = scmp.ne.s32.totalorder %s118, %s121
      %p127 = scmp.eq.s32.totalorder %s14, 0
      %p128 = por %p126, %p127
      %p129 = scmp.ne.s32.totalorder %s118, %s121
      %p130 = scmp.eq.s32.totalorder %s19, 1
      %p131 = por %p129, %p130
      %p132 = scmp.ne.s32.totalorder %s121, %s122
      %p133 = scmp.eq.s32.totalorder %s19, 0
      %p134 = por %p132, %p133
      %p135 = scmp.ne.s32.totalorder %s121, %s122
      %p136 = scmp.eq.s32.totalorder %s20, 1
      %p137 = por %p135, %p136
      %p139 = scmp.ne.s32.totalorder %s122, %s138
      %p140 = scmp.eq.s32.totalorder %s20, 0
      %p141 = por %p139, %p140
      %p142 = scmp.le.s32.totalorder 1, %s14
      %p143 = scmp.lt.s32.totalorder %s14, 3
      %p144 = pnand %p142, %p143
      %p145 = pneg %p144
      // Predicated region
      $region9: #{tpu_custom_call.1} parent=5 // pred_check
        _
      $region10: #{tpu_custom_call.1} parent=5 // pred_check_branch
        %147 = sbr.rel (%p144) target = $region12
      $region11: #{tpu_custom_call.1} parent=5 // pred_region
        %s148 = ssub.s32 %s14, 1
        // Predicated region
        $region13: #{tpu_custom_call.1} parent=11 // pred_check
          %p149 = pneg %p61
        $region14: #{tpu_custom_call.1} parent=11 // pred_check_branch
          %151 = sbr.rel (%p149) target = $region16
        $region15: #{tpu_custom_call.1} parent=11 // pred_region
          _
        $region16: #{tpu_custom_call.1} parent=11 // pred_fallthru
          _
        // Predicated region
        $region17: #{tpu_custom_call.1} parent=11 // pred_check
          %p152 = pneg %p82
        $region18: #{tpu_custom_call.1} parent=11 // pred_check_branch
          %154 = sbr.rel (%p152) target = $region20
        $region19: #{tpu_custom_call.1} parent=11 // pred_region
          _
        $region20: #{tpu_custom_call.1} parent=11 // pred_fallthru
          _
      $region12: #{tpu_custom_call.1} parent=5 // pred_fallthru
        _
      %p155 = scmp.lt.s32.totalorder %s14, 2
      // Predicated region
      $region21: #{tpu_custom_call.1} parent=5 // pred_check
        %p156 = pneg %p155
      $region22: #{tpu_custom_call.1} parent=5 // pred_check_branch
        %158 = sbr.rel (%p156) target = $region24
      $region23: #{tpu_custom_call.1} parent=5 // pred_region
        // Predicated region
        $region25: #{tpu_custom_call.1} parent=23 // pred_check
          %p159 = pneg %p34
        $region26: #{tpu_custom_call.1} parent=23 // pred_check_branch
          %161 = sbr.rel (%p159) target = $region28
        $region27: #{tpu_custom_call.1} parent=23 // pred_region
          %s162 = smul.u32 16, %s14
          %p163 = scmp.lt.s32.totalorder %s162, 31
          %s164 = scalar_select %p163, %s162, 31
          %s165 = smul.addr %s164, 8
          %s166 = scalar_lea.vmem %s0, %s165
          %s167 = smul.u32 16, %s14
        $region28: #{tpu_custom_call.1} parent=23 // pred_fallthru
          _
      $region24: #{tpu_custom_call.1} parent=5 // pred_fallthru
        _
      %p168 = scmp.le.s32.totalorder 1, %s14
      %p169 = scmp.lt.s32.totalorder %s14, 3
      %p170 = pnand %p168, %p169
      %p171 = pneg %p170
      // Predicated region
      $region29: #{tpu_custom_call.1} parent=5 // pred_check
        _
      $region30: #{tpu_custom_call.1} parent=5 // pred_check_branch
        %173 = sbr.rel (%p170) target = $region32
      $region31: #{tpu_custom_call.1} parent=5 // pred_region
        %s174 = ssub.s32 %s14, 1
        %s175 = smul.u32 16, %s19
        %p176 = scmp.lt.s32.totalorder %s175, 31
        %s177 = scalar_select %p176, %s175, 31
        %s178 = smul.addr %s177, 8
        %s179 = scalar_lea.vmem %s0, %s178
        %p180 = pneg %p40
        %p181 = pneg %p37
        %p182 = pneg %p61
        %p183 = pneg %p58
        %p184 = pneg %p82
        %p185 = pneg %p79
        %p186 = pneg %p108
        %p187 = pneg %p105
        %s188 = sand.u32 %s95, 1
        %s189 = scalar_lea.sflag [#allocation3], %s188
        %s190 = sand.u32 %s95, 1
        %s191 = smul.addr %s190, 128
        %s192 = scalar_lea.vmem [#allocation2], %s191
        %p193 = pneg %p134
        %p194 = pneg %p131
        %s195 = smul.u32 16, %s19
        %p196 = scmp.lt.s32.totalorder %s195, 31
        %s197 = scalar_select %p196, %s195, 31
        %s198 = smul.addr %s197, 8
        %s199 = scalar_lea.vmem %s4, %s198
        %s200 = smul.u32 16, %s19
        %p201 = scmp.lt.s32.totalorder %s200, 31
        %s202 = scalar_select %p201, %s200, 31
        %s203 = smul.addr %s202, 8
        %s204 = scalar_lea.vmem %s0, %s203
        %s205 = smul.u32 16, %s19
        %s206 = smul.u32 16, %s19
        %s207 = smul.u32 16, %s19
        %p208 = scmp.lt.s32.totalorder %s207, 31
        %s209 = scalar_select %p208, %s207, 31
        %s210 = smul.addr %s209, 8
        %s211 = scalar_lea.vmem %s4, %s210
        %s212 = smul.u32 16, %s19
        %v213 = vld [vmem:[%s204] sm:$0xff]
        %v214 = vld [vmem:[%s204 + $0x8] sm:$0xff]
        %v215 = vld [vmem:[%s204 + $0x10] sm:$0xff]
        %v216 = vld [vmem:[%s204 + $0x18] sm:$0xff]
        %v217 = vld [vmem:[%s204 + $0x20] sm:$0xff]
        %v218 = vld [vmem:[%s204 + $0x28] sm:$0xff]
        %v219 = vld [vmem:[%s204 + $0x30] sm:$0xff]
        %v220 = vld [vmem:[%s204 + $0x38] sm:$0xff]
        %v221 = vld [vmem:[%s204 + $0x40] sm:$0xff]
        %v222 = vld [vmem:[%s204 + $0x48] sm:$0xff]
        %v223 = vld [vmem:[%s204 + $0x50] sm:$0xff]
        %v224 = vld [vmem:[%s204 + $0x58] sm:$0xff]
        %v225 = vld [vmem:[%s204 + $0x60] sm:$0xff]
        %v226 = vld [vmem:[%s204 + $0x68] sm:$0xff]
        %v227 = vld [vmem:[%s204 + $0x70] sm:$0xff]
        %v228 = vld [vmem:[%s204 + $0x78] sm:$0xff]
        %v229 = vld [vmem:[%s1] sm:$0xff]
        %v230 = vld [vmem:[%s1 + $0x8] sm:$0xff]
        %v231 = vld [vmem:[%s1 + $0x10] sm:$0xff]
        %v232 = vld [vmem:[%s1 + $0x18] sm:$0xff]
        %v233 = vld [vmem:[%s1 + $0x20] sm:$0xff]
        %v234 = vld [vmem:[%s1 + $0x28] sm:$0xff]
        %v235 = vld [vmem:[%s1 + $0x30] sm:$0xff]
        %v236 = vld [vmem:[%s1 + $0x38] sm:$0xff]
        %vm237 = vcmask 523264
        %v239 = vsel %vm237, %v213, 0
        %v242 = vsel %vm237, %v214, 0
        %v245 = vsel %vm237, %v215, 0
        %v248 = vsel %vm237, %v216, 0
        %v251 = vsel %vm237, %v217, 0
        %v254 = vsel %vm237, %v218, 0
        %v257 = vsel %vm237, %v219, 0
        %v260 = vsel %vm237, %v220, 0
        %v263 = vsel %vm237, %v221, 0
        %v266 = vsel %vm237, %v222, 0
        %v269 = vsel %vm237, %v223, 0
        %v272 = vsel %vm237, %v224, 0
        %v275 = vsel %vm237, %v225, 0
        %v278 = vsel %vm237, %v226, 0
        %v281 = vsel %vm237, %v227, 0
        %v284 = vsel %vm237, %v228, 0
        %286 = vmatprep.subr.mxu0 0.0
        %287 = vmatpush1.msra.mxu0 %v229
        %288 = vmatprep.subr.mxu0 0.0
        %289 = vmatpush1.msra.mxu0 %v230
        %290 = vmatprep.subr.mxu0 0.0
        %291 = vmatpush1.msra.mxu0 %v231
        %292 = vmatprep.subr.mxu0 0.0
        %293 = vmatpush1.msra.mxu0 %v232
        %294 = vmatprep.subr.mxu0 0.0
        %295 = vmatpush1.msra.mxu0 %v233
        %296 = vmatprep.subr.mxu0 0.0
        %297 = vmatpush1.msra.mxu0 %v234
        %298 = vmatprep.subr.mxu0 0.0
        %299 = vmatpush1.msra.mxu0 %v235
        %300 = vmatprep.subr.mxu0 0.0
        %301 = vmatpush1.msra.mxu0 %v236
        %302 = vmatprep.subr.mxu0 0.0
        %303 = vmatpush1.msra.mxu0 0.0
        %304 = vmatprep.subr.mxu0 0.0
        %305 = vmatpush1.msra.mxu0 0.0
        %306 = vmatprep.subr.mxu0 0.0
        %307 = vmatpush1.msra.mxu0 0.0
        %308 = vmatprep.subr.mxu0 0.0
        %309 = vmatpush1.msra.mxu0 0.0
        %310 = vmatprep.subr.mxu0 0.0
        %311 = vmatpush1.msra.mxu0 0.0
        %312 = vmatprep.subr.mxu0 0.0
        %313 = vmatpush1.msra.mxu0 0.0
        %314 = vmatprep.subr.mxu0 0.0
        %315 = vmatpush1.msra.mxu0 0.0
        %316 = vmatprep.subr.mxu0 0.0
        %317 = vmatpush1.msra.mxu0 0.0
        %318 = vmatprep.subr.mxu0 0.0
        %319 = vmatpush1.msra.mxu0 0.0
        %320 = vmatprep.subr.mxu0 0.0
        %321 = vmatpush1.msra.mxu0 0.0
        %322 = vmatprep.subr.mxu0 0.0
        %323 = vmatpush1.msra.mxu0 0.0
        %324 = vmatprep.subr.mxu0 0.0
        %325 = vmatpush1.msra.mxu0 0.0
        %326 = vmatprep.subr.mxu0 0.0
        %327 = vmatpush1.msra.mxu0 0.0
        %328 = vmatprep.subr.mxu0 0.0
        %329 = vmatpush1.msra.mxu0 0.0
        %330 = vmatprep.subr.mxu0 0.0
        %331 = vmatpush1.msra.mxu0 0.0
        %332 = vmatprep.subr.mxu0 0.0
        %333 = vmatpush1.msra.mxu0 0.0
        %334 = vmatprep.subr.mxu0 0.0
        %335 = vmatpush1.msra.mxu0 0.0
        %336 = vmatprep.subr.mxu0 0.0
        %337 = vmatpush1.msra.mxu0 0.0
        %338 = vmatprep.subr.mxu0 0.0
        %339 = vmatpush1.msra.mxu0 0.0
        %340 = vmatprep.subr.mxu0 0.0
        %341 = vmatpush1.msra.mxu0 0.0
        %342 = vmatprep.subr.mxu0 0.0
        %343 = vmatpush1.msra.mxu0 0.0
        %344 = vmatprep.subr.mxu0 0.0
        %345 = vmatpush1.msra.mxu0 0.0
        %346 = vmatprep.subr.mxu0 0.0
        %347 = vmatpush1.msra.mxu0 0.0
        %348 = vmatprep.subr.mxu0 0.0
        %349 = vmatpush1.msra.mxu0 0.0
        %350 = vmatprep.mubr.f32.mxu0 0.0
        %351 = vmatmul.mubr.f32.gmra.mrb[0].mxu0 %v239
        %v352 = vpop.f32.mrb[0].mxu0
        %v353 = vadd.f32 0.0, %v352
        %v354 = vpop.f32.mrb[0].mxu0
        %355 = vmatprep.mubr.f32.mxu0 0.0
        %356 = vmatmul.mubr.f32.gmra.mrb[0].mxu0 %v242
        %v357 = vpop.f32.mrb[0].mxu0
        %v358 = vadd.f32 0.0, %v357
        %v359 = vpop.f32.mrb[0].mxu0
        %360 = vmatprep.mubr.f32.mxu0 0.0
        %361 = vmatmul.mubr.f32.gmra.mrb[0].mxu0 %v245
        %v362 = vpop.f32.mrb[0].mxu0
        %v363 = vadd.f32 0.0, %v362
        %v364 = vpop.f32.mrb[0].mxu0
        %365 = vmatprep.mubr.f32.mxu0 0.0
        %366 = vmatmul.mubr.f32.gmra.mrb[0].mxu0 %v248
        %v367 = vpop.f32.mrb[0].mxu0
        %v368 = vadd.f32 0.0, %v367
        %v369 = vpop.f32.mrb[0].mxu0
        %370 = vmatprep.mubr.f32.mxu0 0.0
        %371 = vmatmul.mubr.f32.gmra.mrb[0].mxu0 %v251
        %v372 = vpop.f32.mrb[0].mxu0
        %v373 = vadd.f32 0.0, %v372
        %v374 = vpop.f32.mrb[0].mxu0
        %375 = vmatprep.mubr.f32.mxu0 0.0
        %376 = vmatmul.mubr.f32.gmra.mrb[0].mxu0 %v254
        %v377 = vpop.f32.mrb[0].mxu0
        %v378 = vadd.f32 0.0, %v377
        %v379 = vpop.f32.mrb[0].mxu0
        %380 = vmatprep.mubr.f32.mxu0 0.0
        %381 = vmatmul.mubr.f32.gmra.mrb[0].mxu0 %v257
        %v382 = vpop.f32.mrb[0].mxu0
        %v383 = vadd.f32 0.0, %v382
        %v384 = vpop.f32.mrb[0].mxu0
        %385 = vmatprep.mubr.f32.mxu0 0.0
        %386 = vmatmul.mubr.f32.gmra.mrb[0].mxu0 %v260
        %v387 = vpop.f32.mrb[0].mxu0
        %v388 = vadd.f32 0.0, %v387
        %v389 = vpop.f32.mrb[0].mxu0
        %390 = vmatprep.mubr.f32.mxu0 0.0
        %391 = vmatmul.mubr.f32.gmra.mrb[0].mxu0 %v263
        %v392 = vpop.f32.mrb[0].mxu0
        %v393 = vadd.f32 0.0, %v392
        %v394 = vpop.f32.mrb[0].mxu0
        %395 = vmatprep.mubr.f32.mxu0 0.0
        %396 = vmatmul.mubr.f32.gmra.mrb[0].mxu0 %v266
        %v397 = vpop.f32.mrb[0].mxu0
        %v398 = vadd.f32 0.0, %v397
        %v399 = vpop.f32.mrb[0].mxu0
        %400 = vmatprep.mubr.f32.mxu0 0.0
        %401 = vmatmul.mubr.f32.gmra.mrb[0].mxu0 %v269
        %v402 = vpop.f32.mrb[0].mxu0
        %v403 = vadd.f32 0.0, %v402
        %v404 = vpop.f32.mrb[0].mxu0
        %405 = vmatprep.mubr.f32.mxu0 0.0
        %406 = vmatmul.mubr.f32.gmra.mrb[0].mxu0 %v272
        %v407 = vpop.f32.mrb[0].mxu0
        %v408 = vadd.f32 0.0, %v407
        %v409 = vpop.f32.mrb[0].mxu0
        %410 = vmatprep.mubr.f32.mxu0 0.0
        %411 = vmatmul.mubr.f32.gmra.mrb[0].mxu0 %v275
        %v412 = vpop.f32.mrb[0].mxu0
        %v413 = vadd.f32 0.0, %v412
        %v414 = vpop.f32.mrb[0].mxu0
        %415 = vmatprep.mubr.f32.mxu0 0.0
        %416 = vmatmul.mubr.f32.gmra.mrb[0].mxu0 %v278
        %v417 = vpop.f32.mrb[0].mxu0
        %v418 = vadd.f32 0.0, %v417
        %v419 = vpop.f32.mrb[0].mxu0
        %420 = vmatprep.mubr.f32.mxu0 0.0
        %421 = vmatmul.mubr.f32.gmra.mrb[0].mxu0 %v281
        %v422 = vpop.f32.mrb[0].mxu0
        %v423 = vadd.f32 0.0, %v422
        %v424 = vpop.f32.mrb[0].mxu0
        %425 = vmatprep.mubr.f32.mxu0 0.0
        %426 = vmatmul.mubr.f32.gmra.mrb[0].mxu0 %v284
        %v427 = vpop.f32.mrb[0].mxu0
        %v428 = vadd.f32 0.0, %v427
        %v429 = vpop.f32.mrb[0].mxu0
        %430 = vdwg.mxu0
        %v431 = vld [vmem:[%s2] sm:$0xff]
        %v432 = vld [vmem:[%s2 + $0x8] sm:$0xff]
        %v433 = vld [vmem:[%s2 + $0x10] sm:$0xff]
        %v434 = vld [vmem:[%s2 + $0x18] sm:$0xff]
        %v435 = vld [vmem:[%s2 + $0x20] sm:$0xff]
        %v436 = vld [vmem:[%s2 + $0x28] sm:$0xff]
        %v437 = vld [vmem:[%s2 + $0x30] sm:$0xff]
        %v438 = vld [vmem:[%s2 + $0x38] sm:$0xff]
        %v439 = vld [vmem:[%s2 + $0x40] sm:$0xff]
        %v440 = vld [vmem:[%s2 + $0x48] sm:$0xff]
        %v441 = vld [vmem:[%s2 + $0x50] sm:$0xff]
        %v442 = vld [vmem:[%s2 + $0x58] sm:$0xff]
        %v443 = vld [vmem:[%s2 + $0x60] sm:$0xff]
        %v444 = vld [vmem:[%s2 + $0x68] sm:$0xff]
        %v445 = vld [vmem:[%s2 + $0x70] sm:$0xff]
        %v446 = vld [vmem:[%s2 + $0x78] sm:$0xff]
        %447 = vmatprep.subr.mxu0 0.0
        %448 = vmatpush1.msra.mxu0 %v431
        %449 = vmatprep.subr.mxu0 0.0
        %450 = vmatpush1.msra.mxu0 %v432
        %451 = vmatprep.subr.mxu0 0.0
        %452 = vmatpush1.msra.mxu0 %v433
        %453 = vmatprep.subr.mxu0 0.0
        %454 = vmatpush1.msra.mxu0 %v434
        %455 = vmatprep.subr.mxu0 0.0
        %456 = vmatpush1.msra.mxu0 %v435
        %457 = vmatprep.subr.mxu0 0.0
        %458 = vmatpush1.msra.mxu0 %v436
        %459 = vmatprep.subr.mxu0 0.0
        %460 = vmatpush1.msra.mxu0 %v437
        %461 = vmatprep.subr.mxu0 0.0
        %462 = vmatpush1.msra.mxu0 %v438
        %463 = vmatprep.subr.mxu0 0.0
        %464 = vmatpush1.msra.mxu0 %v439
        %465 = vmatprep.subr.mxu0 0.0
        %466 = vmatpush1.msra.mxu0 %v440
        %467 = vmatprep.subr.mxu0 0.0
        %468 = vmatpush1.msra.mxu0 %v441
        %469 = vmatprep.subr.mxu0 0.0
        %470 = vmatpush1.msra.mxu0 %v442
        %471 = vmatprep.subr.mxu0 0.0
        %472 = vmatpush1.msra.mxu0 %v443
        %473 = vmatprep.subr.mxu0 0.0
        %474 = vmatpush1.msra.mxu0 %v444
        %475 = vmatprep.subr.mxu0 0.0
        %476 = vmatpush1.msra.mxu0 %v445
        %477 = vmatprep.subr.mxu0 0.0
        %478 = vmatpush1.msra.mxu0 %v446
        %479 = vmatprep.subr.mxu0 0.0
        %480 = vmatpush1.msra.mxu0 0.0
        %481 = vmatprep.subr.mxu0 0.0
        %482 = vmatpush1.msra.mxu0 0.0
        %483 = vmatprep.subr.mxu0 0.0
        %484 = vmatpush1.msra.mxu0 0.0
        %485 = vmatprep.subr.mxu0 0.0
        %486 = vmatpush1.msra.mxu0 0.0
        %487 = vmatprep.subr.mxu0 0.0
        %488 = vmatpush1.msra.mxu0 0.0
        %489 = vmatprep.subr.mxu0 0.0
        %490 = vmatpush1.msra.mxu0 0.0
        %491 = vmatprep.subr.mxu0 0.0
        %492 = vmatpush1.msra.mxu0 0.0
        %493 = vmatprep.subr.mxu0 0.0
        %494 = vmatpush1.msra.mxu0 0.0
        %495 = vmatprep.subr.mxu0 0.0
        %496 = vmatpush1.msra.mxu0 0.0
        %497 = vmatprep.subr.mxu0 0.0
        %498 = vmatpush1.msra.mxu0 0.0
        %499 = vmatprep.subr.mxu0 0.0
        %500 = vmatpush1.msra.mxu0 0.0
        %501 = vmatprep.subr.mxu0 0.0
        %502 = vmatpush1.msra.mxu0 0.0
        %503 = vmatprep.subr.mxu0 0.0
        %504 = vmatpush1.msra.mxu0 0.0
        %505 = vmatprep.subr.mxu0 0.0
        %506 = vmatpush1.msra.mxu0 0.0
        %507 = vmatprep.subr.mxu0 0.0
        %508 = vmatpush1.msra.mxu0 0.0
        %509 = vmatprep.subr.mxu0 0.0
        %510 = vmatpush1.msra.mxu0 0.0
        %511 = vmatprep.mubr.f32.mxu0 0.0
        %512 = vmatmul.mubr.f32.gmra.mrb[0].mxu0 %v353
        %v513 = vpop.f32.mrb[0].mxu0
        %v514 = vadd.f32 0.0, %v513
        %v515 = vpop.f32.mrb[0].mxu0
        %516 = vmatprep.mubr.f32.mxu0 0.0
        %517 = vmatmul.mubr.f32.gmra.mrb[0].mxu0 %v358
        %v518 = vpop.f32.mrb[0].mxu0
        %v519 = vadd.f32 0.0, %v518
        %v520 = vpop.f32.mrb[0].mxu0
        %521 = vmatprep.mubr.f32.mxu0 0.0
        %522 = vmatmul.mubr.f32.gmra.mrb[0].mxu0 %v363
        %v523 = vpop.f32.mrb[0].mxu0
        %v524 = vadd.f32 0.0, %v523
        %v525 = vpop.f32.mrb[0].mxu0
        %526 = vmatprep.mubr.f32.mxu0 0.0
        %527 = vmatmul.mubr.f32.gmra.mrb[0].mxu0 %v368
        %v528 = vpop.f32.mrb[0].mxu0
        %v529 = vadd.f32 0.0, %v528
        %v530 = vpop.f32.mrb[0].mxu0
        %531 = vmatprep.mubr.f32.mxu0 0.0
        %532 = vmatmul.mubr.f32.gmra.mrb[0].mxu0 %v373
        %v533 = vpop.f32.mrb[0].mxu0
        %v534 = vadd.f32 0.0, %v533
        %v535 = vpop.f32.mrb[0].mxu0
        %536 = vmatprep.mubr.f32.mxu0 0.0
        %537 = vmatmul.mubr.f32.gmra.mrb[0].mxu0 %v378
        %v538 = vpop.f32.mrb[0].mxu0
        %v539 = vadd.f32 0.0, %v538
        %v540 = vpop.f32.mrb[0].mxu0
        %541 = vmatprep.mubr.f32.mxu0 0.0
        %542 = vmatmul.mubr.f32.gmra.mrb[0].mxu0 %v383
        %v543 = vpop.f32.mrb[0].mxu0
        %v544 = vadd.f32 0.0, %v543
        %v545 = vpop.f32.mrb[0].mxu0
        %546 = vmatprep.mubr.f32.mxu0 0.0
        %547 = vmatmul.mubr.f32.gmra.mrb[0].mxu0 %v388
        %v548 = vpop.f32.mrb[0].mxu0
        %v549 = vadd.f32 0.0, %v548
        %v550 = vpop.f32.mrb[0].mxu0
        %551 = vmatprep.mubr.f32.mxu0 0.0
        %552 = vmatmul.mubr.f32.gmra.mrb[0].mxu0 %v393
        %v553 = vpop.f32.mrb[0].mxu0
        %v554 = vadd.f32 0.0, %v553
        %v555 = vpop.f32.mrb[0].mxu0
        %556 = vmatprep.mubr.f32.mxu0 0.0
        %557 = vmatmul.mubr.f32.gmra.mrb[0].mxu0 %v398
        %v558 = vpop.f32.mrb[0].mxu0
        %v559 = vadd.f32 0.0, %v558
        %v560 = vpop.f32.mrb[0].mxu0
        %561 = vmatprep.mubr.f32.mxu0 0.0
        %562 = vmatmul.mubr.f32.gmra.mrb[0].mxu0 %v403
        %v563 = vpop.f32.mrb[0].mxu0
        %v564 = vadd.f32 0.0, %v563
        %v565 = vpop.f32.mrb[0].mxu0
        %566 = vmatprep.mubr.f32.mxu0 0.0
        %567 = vmatmul.mubr.f32.gmra.mrb[0].mxu0 %v408
        %v568 = vpop.f32.mrb[0].mxu0
        %v569 = vadd.f32 0.0, %v568
        %v570 = vpop.f32.mrb[0].mxu0
        %571 = vmatprep.mubr.f32.mxu0 0.0
        %572 = vmatmul.mubr.f32.gmra.mrb[0].mxu0 %v413
        %v573 = vpop.f32.mrb[0].mxu0
        %v574 = vadd.f32 0.0, %v573
        %v575 = vpop.f32.mrb[0].mxu0
        %576 = vmatprep.mubr.f32.mxu0 0.0
        %577 = vmatmul.mubr.f32.gmra.mrb[0].mxu0 %v418
        %v578 = vpop.f32.mrb[0].mxu0
        %v579 = vadd.f32 0.0, %v578
        %v580 = vpop.f32.mrb[0].mxu0
        %581 = vmatprep.mubr.f32.mxu0 0.0
        %582 = vmatmul.mubr.f32.gmra.mrb[0].mxu0 %v423
        %v583 = vpop.f32.mrb[0].mxu0
        %v584 = vadd.f32 0.0, %v583
        %v585 = vpop.f32.mrb[0].mxu0
        %586 = vmatprep.mubr.f32.mxu0 0.0
        %587 = vmatmul.mubr.f32.gmra.mrb[0].mxu0 %v428
        %v588 = vpop.f32.mrb[0].mxu0
        %v589 = vadd.f32 0.0, %v588
        %v590 = vpop.f32.mrb[0].mxu0
        %591 = vdwg.mxu0
        %592 = vst [vmem:[%s192] sm:$0xff] %v353
        %593 = vst [vmem:[%s192 + $0x8] sm:$0xff] %v358
        %594 = vst [vmem:[%s192 + $0x10] sm:$0xff] %v363
        %595 = vst [vmem:[%s192 + $0x18] sm:$0xff] %v368
        %596 = vst [vmem:[%s192 + $0x20] sm:$0xff] %v373
        %597 = vst [vmem:[%s192 + $0x28] sm:$0xff] %v378
        %598 = vst [vmem:[%s192 + $0x30] sm:$0xff] %v383
        %599 = vst [vmem:[%s192 + $0x38] sm:$0xff] %v388
        %600 = vst [vmem:[%s192 + $0x40] sm:$0xff] %v393
        %601 = vst [vmem:[%s192 + $0x48] sm:$0xff] %v398
        %602 = vst [vmem:[%s192 + $0x50] sm:$0xff] %v403
        %603 = vst [vmem:[%s192 + $0x58] sm:$0xff] %v408
        %604 = vst [vmem:[%s192 + $0x60] sm:$0xff] %v413
        %605 = vst [vmem:[%s192 + $0x68] sm:$0xff] %v418
        %606 = vst [vmem:[%s192 + $0x70] sm:$0xff] %v423
        %607 = vst [vmem:[%s192 + $0x78] sm:$0xff] %v428
        %vm608 = vcmask 15360
        %609 = vst.msk [vmem:[%s211] sm:$0xff] %vm608, %v514
        %610 = vst.msk [vmem:[%s211 + $0x8] sm:$0xff] %vm608, %v519
        %611 = vst.msk [vmem:[%s211 + $0x10] sm:$0xff] %vm608, %v524
        %612 = vst.msk [vmem:[%s211 + $0x18] sm:$0xff] %vm608, %v529
        %613 = vst.msk [vmem:[%s211 + $0x20] sm:$0xff] %vm608, %v534
        %614 = vst.msk [vmem:[%s211 + $0x28] sm:$0xff] %vm608, %v539
        %615 = vst.msk [vmem:[%s211 + $0x30] sm:$0xff] %vm608, %v544
        %616 = vst.msk [vmem:[%s211 + $0x38] sm:$0xff] %vm608, %v549
        %617 = vst.msk [vmem:[%s211 + $0x40] sm:$0xff] %vm608, %v554
        %618 = vst.msk [vmem:[%s211 + $0x48] sm:$0xff] %vm608, %v559
        %619 = vst.msk [vmem:[%s211 + $0x50] sm:$0xff] %vm608, %v564
        %620 = vst.msk [vmem:[%s211 + $0x58] sm:$0xff] %vm608, %v569
        %621 = vst.msk [vmem:[%s211 + $0x60] sm:$0xff] %vm608, %v574
        %622 = vst.msk [vmem:[%s211 + $0x68] sm:$0xff] %vm608, %v579
        %623 = vst.msk [vmem:[%s211 + $0x70] sm:$0xff] %vm608, %v584
        %624 = vst.msk [vmem:[%s211 + $0x78] sm:$0xff] %vm608, %v589
        %s625 = sand.u32 %s95, 1
        %s626 = scalar_lea.sflag [#allocation3], %s625
        %s627 = sand.u32 %s95, 1
        %s628 = smul.addr %s627, 128
        %s629 = scalar_lea.vmem [#allocation2], %s628
        %s630 = smul.u32 16, %s19
        %p631 = scmp.lt.s32.totalorder %s630, 31
        %s632 = scalar_select %p631, %s630, 31
        %s633 = smul.addr %s632, 8
        %s634 = scalar_lea.vmem %s4, %s633
        // Predicated region
        $region33: #{tpu_custom_call.1} parent=31 // pred_check
          %p635 = pneg %p105
        $region34: #{tpu_custom_call.1} parent=31 // pred_check_branch
          %637 = sbr.rel (%p635) target = $region36
        $region35: #{tpu_custom_call.1} parent=31 // pred_region
          %s638 = smul.u32 16, %s19
          %s640 = ssub.s32 2048, 2048
          %641 = vsyncadd %s626, %s640
          %s642 = smul.addr %s638, 128
          %s643 = scalar_lea.hbm %s3, %s642
          %s644 = sshll.u32 %s629, 4
          %s645 = int_to_ptr.vmem [resolvable:$true] %s644
          %650 = dma.vmem_to_hbm [thread:$0]  %s645, 2048, %s643, %s626, 128, 128, 8
        $region36: #{tpu_custom_call.1} parent=31 // pred_fallthru
          _
        // Predicated region
        $region37: #{tpu_custom_call.1} parent=31 // pred_check
          %p651 = pneg %p131
        $region38: #{tpu_custom_call.1} parent=31 // pred_check_branch
          %653 = sbr.rel (%p651) target = $region40
        $region39: #{tpu_custom_call.1} parent=31 // pred_region
          %s654 = smul.u32 16, %s19
        $region40: #{tpu_custom_call.1} parent=31 // pred_fallthru
          _
      $region32: #{tpu_custom_call.1} parent=5 // pred_fallthru
        _
      %p655 = scmp.le.s32.totalorder 2, %s14
      // Predicated region
      $region41: #{tpu_custom_call.1} parent=5 // pred_check
        %p656 = pneg %p655
      $region42: #{tpu_custom_call.1} parent=5 // pred_check_branch
        %658 = sbr.rel (%p656) target = $region44
      $region43: #{tpu_custom_call.1} parent=5 // pred_region
        %s659 = ssub.s32 %s14, 2
        // Predicated region
        $region45: #{tpu_custom_call.1} parent=43 // pred_check
          %p660 = pneg %p111
        $region46: #{tpu_custom_call.1} parent=43 // pred_check_branch
          %662 = sbr.rel (%p660) target = $region48
        $region47: #{tpu_custom_call.1} parent=43 // pred_region
          %s663 = sand.u32 %s96, 1
          %s664 = scalar_lea.sflag [#allocation3], %s663
          %s665 = sand.u32 %s96, 1
          %s666 = smul.addr %s665, 128
          %s667 = scalar_lea.vmem [#allocation2], %s666
          %668 = dma.done %s664, 2048
        $region48: #{tpu_custom_call.1} parent=43 // pred_fallthru
          _
        // Predicated region
        $region49: #{tpu_custom_call.1} parent=43 // pred_check
          %p669 = pneg %p137
        $region50: #{tpu_custom_call.1} parent=43 // pred_check_branch
          %671 = sbr.rel (%p669) target = $region52
        $region51: #{tpu_custom_call.1} parent=43 // pred_region
          %s672 = smul.u32 16, %s20
          %p673 = scmp.lt.s32.totalorder %s672, 31
          %s674 = scalar_select %p673, %s672, 31
          %s675 = smul.addr %s674, 8
          %s676 = scalar_lea.vmem %s4, %s675
        $region52: #{tpu_custom_call.1} parent=43 // pred_fallthru
          _
      $region44: #{tpu_custom_call.1} parent=5 // pred_fallthru
        _
    $region6: #{tpu_custom_call.1} parent=1 // loop_footer
      %s18 = sadd.s32 1, %s14
    $region7: #{tpu_custom_call.1} parent=1 // loop_footer_branch
      %13 = sbr.rel target = $region3
    $region8: #{tpu_custom_call.1} parent=1 // loop_exit
      _
    %677 = vsyncpa [#allocation3], 1
    %s678 = scalar_lea.sflag [#allocation3], 1
    %679 = vsyncpa %s678, 1

</llo_original>
